<compile_context>
chip_gen: v6e
topology: v6e:2x2x1
jax: 0.10.0
libtpu: 0.0.40
codegen_flags: <defaults>
</compile_context>

<pallas_src>
import jax
import jax.numpy as jnp
from jax.experimental import pallas as pl
from jax.experimental.pallas import tpu as pltpu


# ----------------------------------------------------------------------------
# Kernel
# ----------------------------------------------------------------------------
def ffwopn_kernel(x_ref, wnet_ref, bnet_ref,
                  w0_ref, b0_ref,
                  f2_ref, wc1_ref, wc2_ref, bc_ref,
                  f1_ref, out_ref, acc_ref):
    k = pl.program_id(1)

    @pl.when(k == 0)
    def _init():
        acc_ref[...] = jnp.zeros_like(acc_ref)

    # ---- synthetic backbone partial: x @ wnet (bf16 MXU, f32 accumulate) ----
    acc_ref[...] += jnp.dot(x_ref[...], wnet_ref[...],
                            preferred_element_type=jnp.float32)

    @pl.when(k == pl.num_programs(1) - 1)
    def _finalize():
        # backbone nonlinearity + bias in f32 (v5e-safe: no bf16 VPU/EUP math)
        f1_raw = jnp.tanh(acc_ref[...] + bnet_ref[...])          # (TB, F_pad)

        # proj0: Linear(feature_dim -> 128); drop() is identity in eval mode
        f1 = jnp.dot(f1_raw.astype(jnp.bfloat16), w0_ref[...],
                     preferred_element_type=jnp.float32) + b0_ref[...]  # (TB, 128)

        # cls on concat(f1, f2), split as two matmuls; drop() identity in eval
        out = (jnp.dot(f1.astype(jnp.bfloat16), wc1_ref[...],
                       preferred_element_type=jnp.float32)
               + jnp.dot(f2_ref[...], wc2_ref[...],
                         preferred_element_type=jnp.float32)
               + bc_ref[...])                                     # (TB, NC_pad)

        f1_ref[...] = f1
        out_ref[...] = out


# ----------------------------------------------------------------------------
# Helpers
# ----------------------------------------------------------------------------
def _round_up(n, m):
    return ((n + m - 1) // m) * m


def _pad2(a, rows, cols):
    r, c = a.shape
    return jnp.pad(a, ((0, rows - r), (0, cols - c)))


def prepare_weights(params, in_channels, time_step):
    """Hoisted one-time weight preparation: padding + bf16 casts + tiling plan."""
    C, T = in_channels, time_step
    Tp = T // 10
    CT, CTp = C * T, C * Tp
    D = 128                                   # proj0 output width (hard-coded in module)
    F = params["wnet"].shape[1]
    NC = params["bc"].shape[1]

    # padded lane widths (full-tile MXU passes + lane-dense output stores)
    F_p = _round_up(F, 128)
    CTp_p = _round_up(CTp, 128)
    NC_p = _round_up(NC, 128)

    # K (= C*T) tile chosen to minimize padding of the reduction axis
    Kp0 = _round_up(CT, 128)
    best = None
    for tk in (512, 384, 256, 128):
        if tk > Kp0:
            continue
        kp = _round_up(Kp0, tk)
        key = (kp, -tk)                        # least padding, then largest tile
        if best is None or key < best[0]:
            best = (key, tk, kp)
    TK, Kp = best[1], best[2]

    return dict(
        C=C, T=T, Tp=Tp, CT=CT, CTp=CTp, F=F, NC=NC, D=D,
        F_p=F_p, CTp_p=CTp_p, NC_p=NC_p, TK=TK, Kp=Kp,
        wnet=_pad2(params["wnet"], Kp, F_p).astype(jnp.bfloat16),
        bnet=_pad2(params["bnet"], 1, F_p).astype(jnp.float32),
        w0=_pad2(params["w0"], F_p, D).astype(jnp.bfloat16),
        b0=_pad2(params["b0"], 1, D).astype(jnp.float32),
        wc1=_pad2(params["wc1"], D, NC_p).astype(jnp.bfloat16),
        wc2=_pad2(params["wc2"], CTp_p, NC_p).astype(jnp.bfloat16),
        bc=_pad2(params["bc"], 1, NC_p).astype(jnp.float32),
    )


# ----------------------------------------------------------------------------
# Forward
# ----------------------------------------------------------------------------
def ffwopn_forward(x, prep):
    """x: (B, 1, C, T) or (B, C, T) float32.  Returns (f1, f2, out)."""
    if x.ndim > 3:
        x = jnp.squeeze(x, axis=1)                            # (B, C, T)
    B, C, T = x.shape
    Tp, CT, CTp = prep["Tp"], prep["CT"], prep["CTp"]
    D, NC = prep["D"], prep["NC"]
    F_p, CTp_p, NC_p = prep["F_p"], prep["CTp_p"], prep["NC_p"]
    TK, Kp = prep["TK"], prep["Kp"]

    # batch tiling: bf16-friendly (multiple of 16), capped at 256 (v7x 64 MiB safe),
    # >=2 batch tiles when B permits so both v7x TensorCores get work.
    if B >= 16:
        TB = min(256, _round_up(-(-B // 2), 16))
    else:
        TB = 16
    Bp = _round_up(B, TB)
    nB, nK = Bp // TB, Kp // TK

    x = x.astype(jnp.float32)

    # AvgPool1d(10)+flatten: one memory-bound XLA pass in the wrapper (exact f32
    # mean).  The kernel only consumes the pooled result for the cls matmul.
    f2 = x[:, :, :Tp * 10].reshape(B, C, Tp, 10).mean(-1).reshape(B, CTp)

    # x for the backbone matmul: single HBM copy, bf16 (halves the dominant stream)
    x_p = _pad2(x.reshape(B, CT), Bp, Kp).astype(jnp.bfloat16)
    f2_p = _pad2(f2, Bp, CTp_p).astype(jnp.bfloat16)

    # per-step VMEM footprint -> explicit limit (clamped to 64 MiB for v7x)
    vmem_est = (2 * TB * TK * 2                       # x tile (double-buffered bf16)
                + 2 * TK * F_p * 2                    # wnet K-tile
                + 2 * TB * CTp_p * 2                  # f2 tile
                + 2 * (F_p * 4 + F_p * D * 2 + D * 4
                       + D * NC_p * 2 + CTp_p * NC_p * 2 + NC_p * 4)  # resident weights
                + TB * F_p * 4                        # f32 accumulator scratch
                + 2 * (TB * D * 4 + TB * NC_p * 4))   # output blocks
    vmem_limit = int(min(max(int(vmem_est * 1.5) + (4 << 20), 32 << 20), 64 << 20))

    cost = pl.CostEstimate(
        flops=int(2 * Bp * Kp * F_p
                  + 2 * Bp * F_p * D
                  + 2 * Bp * (D + CTp_p) * NC_p),
        transcendentals=int(Bp * F_p),
        bytes_accessed=int(x_p.size * 2 + f2_p.size * 2
                           + nB * Kp * F_p * 2
                           + (prep["w0"].size + prep["wc1"].size + prep["wc2"].size) * 2
                           + (prep["bnet"].size + prep["b0"].size + prep["bc"].size) * 4
                           + Bp * (D + NC_p) * 4),
    )

    f1_p, out_p = pl.pallas_call(
        ffwopn_kernel,
        out_shape=(jax.ShapeDtypeStruct((Bp, D), jnp.float32),
                   jax.ShapeDtypeStruct((Bp, NC_p), jnp.float32)),
        grid_spec=pltpu.PrefetchScalarGridSpec(
            num_scalar_prefetch=0,
            grid=(nB, nK),
            in_specs=[
                pl.BlockSpec((TB, TK), lambda i, k: (i, k)),        # x tile (bf16)
                pl.BlockSpec((TK, F_p), lambda i, k: (k, 0)),       # wnet K-tile
                pl.BlockSpec((1, F_p), lambda i, k: (0, 0)),        # bnet (resident)
                pl.BlockSpec((F_p, D), lambda i, k: (0, 0)),        # w0   (resident)
                pl.BlockSpec((1, D), lambda i, k: (0, 0)),          # b0   (resident)
                pl.BlockSpec((TB, CTp_p), lambda i, k: (i, 0)),     # f2   (per batch tile)
                pl.BlockSpec((D, NC_p), lambda i, k: (0, 0)),       # wc1  (resident)
                pl.BlockSpec((CTp_p, NC_p), lambda i, k: (0, 0)),   # wc2  (resident)
                pl.BlockSpec((1, NC_p), lambda i, k: (0, 0)),       # bc   (resident)
            ],
            out_specs=(
                pl.BlockSpec((TB, D), lambda i, k: (i, 0)),         # f1
                pl.BlockSpec((TB, NC_p), lambda i, k: (i, 0)),      # out
            ),
            scratch_shapes=[pltpu.VMEM((TB, F_p), jnp.float32)],    # acc for x @ wnet
        ),
        compiler_params=pltpu.CompilerParams(
            dimension_semantics=("parallel", "arbitrary"),
            vmem_limit_bytes=vmem_limit),
        cost_estimate=cost,
    )(x_p, prep["wnet"], prep["bnet"], prep["w0"], prep["b0"],
      f2_p, prep["wc1"], prep["wc2"], prep["bc"])

    # strip batch / lane padding; f2 is the exact f32 pooled mean from the wrapper
    return f1_p[:B, :D], f2, out_p[:B, :NC]


# ----------------------------------------------------------------------------
# Params + pure-JAX reference
# ----------------------------------------------------------------------------
def make_params(key, in_channels, time_step, feature_dim, num_classes):
    # TODO(synk): the real `model` backbone is an external constructor argument;
    # replaced here by a synthetic linear+tanh feature extractor with
    # feature_dim outputs so the full fusion forward can run in one kernel.
    C, T, F = in_channels, time_step, feature_dim
    Tp = T // 10
    ks = jax.random.split(key, 5)
    scale = 0.02
    return {
        "wnet": scale * jax.random.normal(ks[0], (C * T, F), jnp.float32),
        "bnet": jnp.zeros((1, F), jnp.float32),
        "w0":   scale * jax.random.normal(ks[1], (F, 128), jnp.float32),
        "b0":   scale * jax.random.normal(ks[2], (1, 128), jnp.float32),
        "wc1":  scale * jax.random.normal(ks[3], (128, num_classes), jnp.float32),
        "wc2":  scale * jax.random.normal(ks[4], (C * Tp, num_classes), jnp.float32),
        "bc":   jnp.zeros((1, num_classes), jnp.float32),
    }


def ffwopn_reference(x, params):
    """Pure-JAX f32 reference mirroring the PyTorch forward (eval mode)."""
    if x.ndim > 3:
        x = jnp.squeeze(x, axis=1)
    B, C, T = x.shape
    Tp = T // 10
    f1_raw = jnp.tanh(x.reshape(B, C * T) @ params["wnet"] + params["bnet"])
    f1 = f1_raw @ params["w0"] + params["b0"]
    f2 = x[:, :, :Tp * 10].reshape(B, C, Tp, 10).mean(-1).reshape(B, C * Tp)
    f = jnp.concatenate([f1, f2], axis=-1)
    wc = jnp.concatenate([params["wc1"], params["wc2"]], axis=0)
    out = f @ wc + params["bc"]
    return f1, f2, out


if __name__ == "__main__":
    B, C, T = 2, 4, 20            # batch, in_channels, time_step
    F, num_classes = 32, 3        # synthetic backbone feature_dim, classes

    key = jax.random.PRNGKey(0)
    k_x, k_p = jax.random.split(key)
    x = jax.random.normal(k_x, (B, 1, C, T), jnp.float32)      # NCHW-style input
    params = make_params(k_p, C, T, F, num_classes)

    prep = prepare_weights(params, C, T)                        # one-time prep
    f1, f2, out = ffwopn_forward(x, prep)
    jax.block_until_ready((f1, f2, out))

    rf1, rf2, rout = ffwopn_reference(x, params)
    assert f1.shape == (B, 128) and f2.shape == (B, C * (T // 10))
    assert out.shape == (B, num_classes)
    # bf16 MXU operands -> loosened tolerance vs the f32 reference for f1/out
    assert jnp.allclose(f1, rf1, atol=1e-2, rtol=1e-2)
    # f2 is the exact f32 pooled mean
    assert jnp.allclose(f2, rf2, atol=1e-5, rtol=1e-5)
    assert jnp.allclose(out, rout, atol=1e-2, rtol=1e-2)

    print("KERNEL_OK")
</pallas_src>

<mosaic_0001>
module attributes {stable_mosaic.version = 11 : i64} {
  func.func @ffwopn_kernel(%arg0: i32, %arg1: i32, %arg2: memref<16x128xbf16, #tpu.memory_space<vmem>>, %arg3: memref<128x128xbf16, #tpu.memory_space<vmem>>, %arg4: memref<1x128xf32, #tpu.memory_space<vmem>>, %arg5: memref<128x128xbf16, #tpu.memory_space<vmem>>, %arg6: memref<1x128xf32, #tpu.memory_space<vmem>>, %arg7: memref<16x128xbf16, #tpu.memory_space<vmem>>, %arg8: memref<128x128xbf16, #tpu.memory_space<vmem>>, %arg9: memref<128x128xbf16, #tpu.memory_space<vmem>>, %arg10: memref<1x128xf32, #tpu.memory_space<vmem>>, %arg11: memref<16x128xf32, #tpu.memory_space<vmem>>, %arg12: memref<16x128xf32, #tpu.memory_space<vmem>>, %arg13: memref<16x128xf32, #tpu.memory_space<vmem>>) attributes {dimension_semantics = [#tpu.dimension_semantics<parallel>, #tpu.dimension_semantics<arbitrary>], iteration_bounds = array<i64: 1, 1>, scalar_prefetch = 0 : i64, scratch_operands = 1 : i64, tpu.core_type = #tpu.core_type<tc>, window_params = [{transform_indices = @transform_0, window_bounds = array<i64: 16, 128>}, {transform_indices = @transform_1, window_bounds = array<i64: 128, 128>}, {pipeline_mode = #tpu.pipeline_mode<synchronous>, transform_indices = @transform_2, window_bounds = array<i64: 1, 128>}, {pipeline_mode = #tpu.pipeline_mode<synchronous>, transform_indices = @transform_3, window_bounds = array<i64: 128, 128>}, {pipeline_mode = #tpu.pipeline_mode<synchronous>, transform_indices = @transform_4, window_bounds = array<i64: 1, 128>}, {transform_indices = @transform_5, window_bounds = array<i64: 16, 128>}, {pipeline_mode = #tpu.pipeline_mode<synchronous>, transform_indices = @transform_6, window_bounds = array<i64: 128, 128>}, {pipeline_mode = #tpu.pipeline_mode<synchronous>, transform_indices = @transform_7, window_bounds = array<i64: 128, 128>}, {pipeline_mode = #tpu.pipeline_mode<synchronous>, transform_indices = @transform_8, window_bounds = array<i64: 1, 128>}, {transform_indices = @transform_9, window_bounds = array<i64: 16, 128>}, {transform_indices = @transform_10, window_bounds = array<i64: 16, 128>}]} {
    %c0_i32 = arith.constant 0 : i32
    %0 = arith.cmpi eq, %arg1, %c0_i32 : i32
    %1 = arith.extui %0 : i1 to i32
    %c0_i32_0 = arith.constant 0 : i32
    %2 = arith.cmpi ne, %1, %c0_i32_0 : i32
    scf.if %2 {
      %cst_10 = arith.constant 0.000000e+00 : f32
      %12 = vector.broadcast %cst_10 : f32 to vector<16x128xf32>
      %c0_11 = arith.constant 0 : index
      %c0_12 = arith.constant 0 : index
      %13 = vector.load %arg13[%c0_11, %c0_12] : memref<16x128xf32, #tpu.memory_space<vmem>>, vector<16x128xf32>
      tpu.vector_store %arg13[%c0_11, %c0_12], %12 {strides = array<i32>} : memref<16x128xf32, #tpu.memory_space<vmem>>, vector<16x128xf32>,
    } else {
    }
    %c0 = arith.constant 0 : index
    %c0_1 = arith.constant 0 : index
    %3 = vector.load %arg13[%c0, %c0_1] : memref<16x128xf32, #tpu.memory_space<vmem>>, vector<16x128xf32>
    %c0_2 = arith.constant 0 : index
    %c0_3 = arith.constant 0 : index
    %4 = vector.load %arg2[%c0_2, %c0_3] : memref<16x128xbf16, #tpu.memory_space<vmem>>, vector<16x128xbf16>
    %c0_4 = arith.constant 0 : index
    %c0_5 = arith.constant 0 : index
    %5 = vector.load %arg3[%c0_4, %c0_5] : memref<128x128xbf16, #tpu.memory_space<vmem>>, vector<128x128xbf16>
    %cst = arith.constant dense<0.000000e+00> : vector<16x128xf32>
    %6 = tpu.matmul %4, %5, %cst {dimension_numbers = #tpu.dot_dimension_numbers<[1], [0], [0], [1], [0, 0, 1, 1], [], []>} : vector<16x128xbf16>, vector<128x128xbf16>, vector<16x128xf32> -> vector<16x128xf32>
    %7 = arith.addf %3, %6 : vector<16x128xf32>
    %c0_6 = arith.constant 0 : index
    %c0_7 = arith.constant 0 : index
    %8 = vector.load %arg13[%c0_6, %c0_7] : memref<16x128xf32, #tpu.memory_space<vmem>>, vector<16x128xf32>
    tpu.vector_store %arg13[%c0_6, %c0_7], %7 {strides = array<i32>} : memref<16x128xf32, #tpu.memory_space<vmem>>, vector<16x128xf32>,
    %c0_i32_8 = arith.constant 0 : i32
    %9 = arith.cmpi eq, %arg1, %c0_i32_8 : i32
    %10 = arith.extui %9 : i1 to i32
    %c0_i32_9 = arith.constant 0 : i32
    %11 = arith.cmpi ne, %10, %c0_i32_9 : i32
    scf.if %11 {
      %c0_10 = arith.constant 0 : index
      %c0_11 = arith.constant 0 : index
      %12 = vector.load %arg13[%c0_10, %c0_11] : memref<16x128xf32, #tpu.memory_space<vmem>>, vector<16x128xf32>
      %c0_12 = arith.constant 0 : index
      %c0_13 = arith.constant 0 : index
      %13 = vector.load %arg4[%c0_12, %c0_13] : memref<1x128xf32, #tpu.memory_space<vmem>>, vector<1x128xf32>
      %14 = vector.broadcast %13 : vector<1x128xf32> to vector<16x128xf32>
      %15 = arith.addf %12, %14 : vector<16x128xf32>
      %16 = math.tanh %15 : vector<16x128xf32>
      %17 = arith.truncf %16 : vector<16x128xf32> to vector<16x128xbf16>
      %c0_14 = arith.constant 0 : index
      %c0_15 = arith.constant 0 : index
      %18 = vector.load %arg5[%c0_14, %c0_15] : memref<128x128xbf16, #tpu.memory_space<vmem>>, vector<128x128xbf16>
      %cst_16 = arith.constant dense<0.000000e+00> : vector<16x128xf32>
      %19 = tpu.matmul %17, %18, %cst_16 {dimension_numbers = #tpu.dot_dimension_numbers<[1], [0], [0], [1], [0, 0, 1, 1], [], []>} : vector<16x128xbf16>, vector<128x128xbf16>, vector<16x128xf32> -> vector<16x128xf32>
      %c0_17 = arith.constant 0 : index
      %c0_18 = arith.constant 0 : index
      %20 = vector.load %arg6[%c0_17, %c0_18] : memref<1x128xf32, #tpu.memory_space<vmem>>, vector<1x128xf32>
      %21 = vector.broadcast %20 : vector<1x128xf32> to vector<16x128xf32>
      %22 = arith.addf %19, %21 : vector<16x128xf32>
      %23 = arith.truncf %22 : vector<16x128xf32> to vector<16x128xbf16>
      %c0_19 = arith.constant 0 : index
      %c0_20 = arith.constant 0 : index
      %24 = vector.load %arg8[%c0_19, %c0_20] : memref<128x128xbf16, #tpu.memory_space<vmem>>, vector<128x128xbf16>
      %cst_21 = arith.constant dense<0.000000e+00> : vector<16x128xf32>
      %25 = tpu.matmul %23, %24, %cst_21 {dimension_numbers = #tpu.dot_dimension_numbers<[1], [0], [0], [1], [0, 0, 1, 1], [], []>} : vector<16x128xbf16>, vector<128x128xbf16>, vector<16x128xf32> -> vector<16x128xf32>
      %c0_22 = arith.constant 0 : index
      %c0_23 = arith.constant 0 : index
      %26 = vector.load %arg7[%c0_22, %c0_23] : memref<16x128xbf16, #tpu.memory_space<vmem>>, vector<16x128xbf16>
      %c0_24 = arith.constant 0 : index
      %c0_25 = arith.constant 0 : index
      %27 = vector.load %arg9[%c0_24, %c0_25] : memref<128x128xbf16, #tpu.memory_space<vmem>>, vector<128x128xbf16>
      %cst_26 = arith.constant dense<0.000000e+00> : vector<16x128xf32>
      %28 = tpu.matmul %26, %27, %cst_26 {dimension_numbers = #tpu.dot_dimension_numbers<[1], [0], [0], [1], [0, 0, 1, 1], [], []>} : vector<16x128xbf16>, vector<128x128xbf16>, vector<16x128xf32> -> vector<16x128xf32>
      %29 = arith.addf %25, %28 : vector<16x128xf32>
      %c0_27 = arith.constant 0 : index
      %c0_28 = arith.constant 0 : index
      %30 = vector.load %arg10[%c0_27, %c0_28] : memref<1x128xf32, #tpu.memory_space<vmem>>, vector<1x128xf32>
      %31 = vector.broadcast %30 : vector<1x128xf32> to vector<16x128xf32>
      %32 = arith.addf %29, %31 : vector<16x128xf32>
      %c0_29 = arith.constant 0 : index
      %c0_30 = arith.constant 0 : index
      %33 = vector.load %arg11[%c0_29, %c0_30] : memref<16x128xf32, #tpu.memory_space<vmem>>, vector<16x128xf32>
      tpu.vector_store %arg11[%c0_29, %c0_30], %22 {strides = array<i32>} : memref<16x128xf32, #tpu.memory_space<vmem>>, vector<16x128xf32>,
      %c0_31 = arith.constant 0 : index
      %c0_32 = arith.constant 0 : index
      %34 = vector.load %arg12[%c0_31, %c0_32] : memref<16x128xf32, #tpu.memory_space<vmem>>, vector<16x128xf32>
      tpu.vector_store %arg12[%c0_31, %c0_32], %32 {strides = array<i32>} : memref<16x128xf32, #tpu.memory_space<vmem>>, vector<16x128xf32>,
    } else {
    }
    return
  }
  func.func @transform_0(%arg0: i32, %arg1: i32) -> (i32, i32) {
    %c0_i32 = arith.constant 0 : i32
    return %arg0, %arg1 : i32, i32
  }
  func.func @transform_1(%arg0: i32, %arg1: i32) -> (i32, i32) {
    %c0_i32 = arith.constant 0 : i32
    %c0_i32_0 = arith.constant 0 : i32
    return %arg1, %c0_i32 : i32, i32
  }
  func.func @transform_2(%arg0: i32, %arg1: i32) -> (i32, i32) {
    %c0_i32 = arith.constant 0 : i32
    %c0_i32_0 = arith.constant 0 : i32
    %c0_i32_1 = arith.constant 0 : i32
    return %c0_i32, %c0_i32_0 : i32, i32
  }
  func.func @transform_3(%arg0: i32, %arg1: i32) -> (i32, i32) {
    %c0_i32 = arith.constant 0 : i32
    %c0_i32_0 = arith.constant 0 : i32
    %c0_i32_1 = arith.constant 0 : i32
    return %c0_i32, %c0_i32_0 : i32, i32
  }
  func.func @transform_4(%arg0: i32, %arg1: i32) -> (i32, i32) {
    %c0_i32 = arith.constant 0 : i32
    %c0_i32_0 = arith.constant 0 : i32
    %c0_i32_1 = arith.constant 0 : i32
    return %c0_i32, %c0_i32_0 : i32, i32
  }
  func.func @transform_5(%arg0: i32, %arg1: i32) -> (i32, i32) {
    %c0_i32 = arith.constant 0 : i32
    %c0_i32_0 = arith.constant 0 : i32
    return %arg0, %c0_i32 : i32, i32
  }
  func.func @transform_6(%arg0: i32, %arg1: i32) -> (i32, i32) {
    %c0_i32 = arith.constant 0 : i32
    %c0_i32_0 = arith.constant 0 : i32
    %c0_i32_1 = arith.constant 0 : i32
    return %c0_i32, %c0_i32_0 : i32, i32
  }
  func.func @transform_7(%arg0: i32, %arg1: i32) -> (i32, i32) {
    %c0_i32 = arith.constant 0 : i32
    %c0_i32_0 = arith.constant 0 : i32
    %c0_i32_1 = arith.constant 0 : i32
    return %c0_i32, %c0_i32_0 : i32, i32
  }
  func.func @transform_8(%arg0: i32, %arg1: i32) -> (i32, i32) {
    %c0_i32 = arith.constant 0 : i32
    %c0_i32_0 = arith.constant 0 : i32
    %c0_i32_1 = arith.constant 0 : i32
    return %c0_i32, %c0_i32_0 : i32, i32
  }
  func.func @transform_9(%arg0: i32, %arg1: i32) -> (i32, i32) {
    %c0_i32 = arith.constant 0 : i32
    %c0_i32_0 = arith.constant 0 : i32
    return %arg0, %c0_i32 : i32, i32
  }
  func.func @transform_10(%arg0: i32, %arg1: i32) -> (i32, i32) {
    %c0_i32 = arith.constant 0 : i32
    %c0_i32_0 = arith.constant 0 : i32
    return %arg0, %c0_i32 : i32, i32
  }
}

</mosaic_0001>

<llo_original>
// kernel: tpu_custom_call.1
$region0: #{tpu_custom_call.1}
  #allocation0 [shape = 'u32[]', space=smem, size = 0x4, offset = 0x4, fixed_abs, tag = 'smem constant byte address 0x4 - core index']
  #allocation1 [shape = 'u32[144,128]{1,0:T(1,128)}', space=vmem, size = 0x12000, scoped, tag = 'internal scratch']
  #allocation2 [shape = 'f32[16,128]{1,0:T(8,128)}', space=vmem, size = 0x2000, scoped, tag = 'scratch operand']
  %s0 = inlined_call_operand.hbm [shape: bf16[16,128], index: 0, kind: input, shape index: {}]
  %s1 = inlined_call_operand.hbm [shape: bf16[128,128], index: 1, kind: input, shape index: {}]
  %s2 = inlined_call_operand.vmem [shape: f32[1,128], index: 2, kind: input, shape index: {}]
  %s3 = inlined_call_operand.hbm [shape: bf16[128,128], index: 3, kind: input, shape index: {}]
  %s4 = inlined_call_operand.hbm [shape: f32[1,128], index: 4, kind: input, shape index: {}]
  %s5 = inlined_call_operand.vmem [shape: bf16[16,128], index: 5, kind: input, shape index: {}]
  %s6 = inlined_call_operand.hbm [shape: bf16[128,128], index: 6, kind: input, shape index: {}]
  %s7 = inlined_call_operand.hbm [shape: bf16[128,128], index: 7, kind: input, shape index: {}]
  %s8 = inlined_call_operand.vmem [shape: f32[1,128], index: 8, kind: input, shape index: {}]
  %s9 = inlined_call_operand.hbm [shape: f32[16,128], index: 9, kind: output, shape index: {0}]
  %s10 = inlined_call_operand.hbm [shape: f32[16,128], index: 10, kind: output, shape index: {1}]
  %11 = xla_tuple %s9, %s10
  %s12 = sld [smem:[#allocation0]]
  $region86: #{tpu_custom_call.1} parent=0
    _
  %s14 = ssub.s32 1, %s12
  %s15 = scalar_select 0, %s14, %s12
  $region1: #{tpu_custom_call.1} parent=0
    #allocation3 [shape = 'u8[4096]{0}', space=vmem, size = 0x1000, scoped, tag = 'input window, operand 0, single buffered']
    #allocation4 [shape = 's32[1]{0}', space=sflag, size = 0x4, scoped, tag = 'scoped memory for tpu_custom_call.1']
    #allocation5 [shape = 's32[1]{0}', space=sflag, size = 0x4, scoped, tag = 'scoped memory for tpu_custom_call.1']
    #allocation6 [shape = 'u8[32768]{0}', space=vmem, size = 0x8000, scoped, tag = 'input window, operand 1, single buffered']
    #allocation7 [shape = 's32[1]{0}', space=sflag, size = 0x4, scoped, tag = 'scoped memory for tpu_custom_call.1']
    #allocation8 [shape = 'u8[32768]{0}', space=vmem, size = 0x8000, scoped, tag = 'input window, operand 3, single buffered']
    #allocation9 [shape = 'u8[512]{0}', space=vmem, size = 0x400, scoped, tag = 'input window, operand 4, single buffered']
    #allocation10 [shape = 's32[1]{0}', space=sflag, size = 0x4, scoped, tag = 'scoped memory for tpu_custom_call.1']
    #allocation11 [shape = 'u8[32768]{0}', space=vmem, size = 0x8000, scoped, tag = 'input window, operand 6, single buffered']
    #allocation12 [shape = 'u8[32768]{0}', space=vmem, size = 0x8000, scoped, tag = 'input window, operand 7, single buffered']
    #allocation13 [shape = 's32[1]{0}', space=sflag, size = 0x4, scoped, tag = 'scoped memory for tpu_custom_call.1']
    #allocation14 [shape = 'u8[8192]{0}', space=vmem, size = 0x2000, scoped, tag = 'output window, operand 0, single buffered']
    #allocation15 [shape = 'u8[8192]{0}', space=vmem, size = 0x2000, scoped, tag = 'output window, operand 1, single buffered']
    #allocation16 [shape = 's32[1]{0}', space=sflag, size = 0x4, scoped, tag = 'scoped memory for tpu_custom_call.1']
    %16 = vsyncpa [#allocation4], 0
    %17 = vsyncpa [#allocation7], 0
    %18 = vsyncpa [#allocation10], 0
    %19 = vsyncpa [#allocation13], 0
    %20 = vsyncpa [#allocation5], 0
    %21 = vsyncpa [#allocation16], 0
    // Predicated region
    $region2: #{tpu_custom_call.1} parent=1 // pred_check
      _
    $region3: #{tpu_custom_call.1} parent=1 // pred_check_branch
      %23 = sbr.rel (0) target = $region5
    $region4: #{tpu_custom_call.1} parent=1 // pred_region
      %s25 = ssub.s32 128, 128
      %26 = vsyncadd [#allocation4], %s25
      %s27 = sshll.u32 [#allocation3], 4
      %s28 = int_to_ptr.vmem [resolvable:$true] %s27
      %33 = dma.hbm_to_vmem [thread:$0]  %s0, 128, %s28, [#allocation4], 64, 64, 4
    $region5: #{tpu_custom_call.1} parent=1 // pred_fallthru
      _
    // Predicated region
    $region6: #{tpu_custom_call.1} parent=1 // pred_check
      _
    $region7: #{tpu_custom_call.1} parent=1 // pred_check_branch
      %35 = sbr.rel (0) target = $region9
    $region8: #{tpu_custom_call.1} parent=1 // pred_region
      %s37 = ssub.s32 1024, 1024
      %38 = vsyncadd [#allocation7], %s37
      %s39 = sshll.u32 [#allocation6], 4
      %s40 = int_to_ptr.vmem [resolvable:$true] %s39
      %45 = dma.hbm_to_vmem [thread:$0]  %s1, 1024, %s40, [#allocation7], 64, 64, 4
    $region9: #{tpu_custom_call.1} parent=1 // pred_fallthru
      _
    // Predicated region
    $region10: #{tpu_custom_call.1} parent=1 // pred_check
      _
    $region11: #{tpu_custom_call.1} parent=1 // pred_check_branch
      %47 = sbr.rel (0) target = $region13
    $region12: #{tpu_custom_call.1} parent=1 // pred_region
      _
    $region13: #{tpu_custom_call.1} parent=1 // pred_fallthru
      _
    // Predicated region
    $region14: #{tpu_custom_call.1} parent=1 // pred_check
      _
    $region15: #{tpu_custom_call.1} parent=1 // pred_check_branch
      %49 = sbr.rel (0) target = $region17
    $region16: #{tpu_custom_call.1} parent=1 // pred_region
      %s51 = ssub.s32 1024, 1024
      %52 = vsyncadd [#allocation7], %s51
      %s53 = sshll.u32 [#allocation8], 4
      %s54 = int_to_ptr.vmem [resolvable:$true] %s53
      %59 = dma.hbm_to_vmem [thread:$0]  %s3, 1024, %s54, [#allocation7], 64, 64, 4
    $region17: #{tpu_custom_call.1} parent=1 // pred_fallthru
      _
    // Predicated region
    $region18: #{tpu_custom_call.1} parent=1 // pred_check
      _
    $region19: #{tpu_custom_call.1} parent=1 // pred_check_branch
      %61 = sbr.rel (0) target = $region21
    $region20: #{tpu_custom_call.1} parent=1 // pred_region
      %s63 = ssub.s32 16, 16
      %64 = vsyncadd [#allocation10], %s63
      %s66 = sshll.u32 [#allocation9], 4
      %s67 = int_to_ptr.vmem [resolvable:$true] %s66
      %69 = dma.hbm_to_vmem [thread:$0]  %s4, 16, %s67, [#allocation10]
    $region21: #{tpu_custom_call.1} parent=1 // pred_fallthru
      _
    // Predicated region
    $region22: #{tpu_custom_call.1} parent=1 // pred_check
      _
    $region23: #{tpu_custom_call.1} parent=1 // pred_check_branch
      %71 = sbr.rel (0) target = $region25
    $region24: #{tpu_custom_call.1} parent=1 // pred_region
      _
    $region25: #{tpu_custom_call.1} parent=1 // pred_fallthru
      _
    // Predicated region
    $region26: #{tpu_custom_call.1} parent=1 // pred_check
      _
    $region27: #{tpu_custom_call.1} parent=1 // pred_check_branch
      %73 = sbr.rel (0) target = $region29
    $region28: #{tpu_custom_call.1} parent=1 // pred_region
      %s75 = ssub.s32 1024, 1024
      %76 = vsyncadd [#allocation10], %s75
      %s77 = sshll.u32 [#allocation11], 4
      %s78 = int_to_ptr.vmem [resolvable:$true] %s77
      %83 = dma.hbm_to_vmem [thread:$0]  %s6, 1024, %s78, [#allocation10], 64, 64, 4
    $region29: #{tpu_custom_call.1} parent=1 // pred_fallthru
      _
    // Predicated region
    $region30: #{tpu_custom_call.1} parent=1 // pred_check
      _
    $region31: #{tpu_custom_call.1} parent=1 // pred_check_branch
      %85 = sbr.rel (0) target = $region33
    $region32: #{tpu_custom_call.1} parent=1 // pred_region
      %s87 = ssub.s32 1024, 1024
      %88 = vsyncadd [#allocation13], %s87
      %s89 = sshll.u32 [#allocation12], 4
      %s90 = int_to_ptr.vmem [resolvable:$true] %s89
      %95 = dma.hbm_to_vmem [thread:$0]  %s7, 1024, %s90, [#allocation13], 64, 64, 4
    $region33: #{tpu_custom_call.1} parent=1 // pred_fallthru
      _
    // Predicated region
    $region34: #{tpu_custom_call.1} parent=1 // pred_check
      _
    $region35: #{tpu_custom_call.1} parent=1 // pred_check_branch
      %97 = sbr.rel (0) target = $region37
    $region36: #{tpu_custom_call.1} parent=1 // pred_region
      _
    $region37: #{tpu_custom_call.1} parent=1 // pred_fallthru
      _
    // Predicated region
    $region38: #{tpu_custom_call.1} parent=1 // pred_check
      _
    $region39: #{tpu_custom_call.1} parent=1 // pred_check_branch
      %99 = sbr.rel (0) target = $region41
    $region40: #{tpu_custom_call.1} parent=1 // pred_region
      %100 = dma.done [#allocation4], 128
    $region41: #{tpu_custom_call.1} parent=1 // pred_fallthru
      _
    // Predicated region
    $region42: #{tpu_custom_call.1} parent=1 // pred_check
      _
    $region43: #{tpu_custom_call.1} parent=1 // pred_check_branch
      %102 = sbr.rel (0) target = $region45
    $region44: #{tpu_custom_call.1} parent=1 // pred_region
      %103 = dma.done [#allocation7], 1024
    $region45: #{tpu_custom_call.1} parent=1 // pred_fallthru
      _
    // Predicated region
    $region46: #{tpu_custom_call.1} parent=1 // pred_check
      _
    $region47: #{tpu_custom_call.1} parent=1 // pred_check_branch
      %105 = sbr.rel (0) target = $region49
    $region48: #{tpu_custom_call.1} parent=1 // pred_region
      %106 = dma.done [#allocation7], 1024
    $region49: #{tpu_custom_call.1} parent=1 // pred_fallthru
      _
    // Predicated region
    $region50: #{tpu_custom_call.1} parent=1 // pred_check
      _
    $region51: #{tpu_custom_call.1} parent=1 // pred_check_branch
      %108 = sbr.rel (0) target = $region53
    $region52: #{tpu_custom_call.1} parent=1 // pred_region
      %109 = dma.done [#allocation10], 16
    $region53: #{tpu_custom_call.1} parent=1 // pred_fallthru
      _
    // Predicated region
    $region54: #{tpu_custom_call.1} parent=1 // pred_check
      _
    $region55: #{tpu_custom_call.1} parent=1 // pred_check_branch
      %111 = sbr.rel (0) target = $region57
    $region56: #{tpu_custom_call.1} parent=1 // pred_region
      %112 = dma.done [#allocation10], 1024
    $region57: #{tpu_custom_call.1} parent=1 // pred_fallthru
      _
    // Predicated region
    $region58: #{tpu_custom_call.1} parent=1 // pred_check
      _
    $region59: #{tpu_custom_call.1} parent=1 // pred_check_branch
      %114 = sbr.rel (0) target = $region61
    $region60: #{tpu_custom_call.1} parent=1 // pred_region
      %115 = dma.done [#allocation13], 1024
    $region61: #{tpu_custom_call.1} parent=1 // pred_fallthru
      _
    %p117 = scmp.eq.s32.totalorder 0, 0
    // Predicated region
    $region62: #{tpu_custom_call.1} parent=1 // pred_check
      %p118 = pneg %p117
    $region63: #{tpu_custom_call.1} parent=1 // pred_check_branch
      %120 = sbr.rel (%p118) target = $region65
    $region64: #{tpu_custom_call.1} parent=1 // pred_region
      %121 = vst [vmem:[#allocation2] sm:$0xff] 0.0
      %122 = vst [vmem:[#allocation2 + $0x8] sm:$0xff] 0.0
    $region65: #{tpu_custom_call.1} parent=1 // pred_fallthru
      _
    %v123 = vld [vmem:[#allocation2] sm:$0xff]
    %v124 = vld [vmem:[#allocation2 + $0x8] sm:$0xff]
    %v125 = vld [vmem:[#allocation3] sm:$0xf]
    %v126 = vld [vmem:[#allocation3 + $0x4] sm:$0xf]
    %v127 = vld [vmem:[#allocation6] sm:$0xf]
    %v128 = vld [vmem:[#allocation6 + $0x4] sm:$0xf]
    %v129 = vld [vmem:[#allocation6 + $0x8] sm:$0xf]
    %v130 = vld [vmem:[#allocation6 + $0xc] sm:$0xf]
    %v131 = vld [vmem:[#allocation6 + $0x10] sm:$0xf]
    %v132 = vld [vmem:[#allocation6 + $0x14] sm:$0xf]
    %v133 = vld [vmem:[#allocation6 + $0x18] sm:$0xf]
    %v134 = vld [vmem:[#allocation6 + $0x1c] sm:$0xf]
    %v135 = vld [vmem:[#allocation6 + $0x20] sm:$0xf]
    %v136 = vld [vmem:[#allocation6 + $0x24] sm:$0xf]
    %v137 = vld [vmem:[#allocation6 + $0x28] sm:$0xf]
    %v138 = vld [vmem:[#allocation6 + $0x2c] sm:$0xf]
    %v139 = vld [vmem:[#allocation6 + $0x30] sm:$0xf]
    %v140 = vld [vmem:[#allocation6 + $0x34] sm:$0xf]
    %v141 = vld [vmem:[#allocation6 + $0x38] sm:$0xf]
    %v142 = vld [vmem:[#allocation6 + $0x3c] sm:$0xf]
    %v145 = vunpack.c.l.b16 %v125
    %v146 = vunpack.c.l.b16 %v126
    %v147 = vpack.c.b16 %v146, %v145
    %v165 = vunpack.c.l.b16 %v127
    %v166 = vunpack.c.l.b16 %v128
    %v167 = vunpack.c.l.b16 %v129
    %v168 = vunpack.c.l.b16 %v130
    %v169 = vunpack.c.l.b16 %v131
    %v170 = vunpack.c.l.b16 %v132
    %v171 = vunpack.c.l.b16 %v133
    %v172 = vunpack.c.l.b16 %v134
    %v173 = vunpack.c.l.b16 %v135
    %v174 = vunpack.c.l.b16 %v136
    %v175 = vunpack.c.l.b16 %v137
    %v176 = vunpack.c.l.b16 %v138
    %v177 = vunpack.c.l.b16 %v139
    %v178 = vunpack.c.l.b16 %v140
    %v179 = vunpack.c.l.b16 %v141
    %v180 = vunpack.c.l.b16 %v142
    %v181 = vpack.c.b16 %v166, %v165
    %v182 = vpack.c.b16 %v168, %v167
    %v183 = vpack.c.b16 %v170, %v169
    %v184 = vpack.c.b16 %v172, %v171
    %v185 = vpack.c.b16 %v174, %v173
    %v186 = vpack.c.b16 %v176, %v175
    %v187 = vpack.c.b16 %v178, %v177
    %v188 = vpack.c.b16 %v180, %v179
    %197 = vmatprep.subr.bf16.mxu0 0
    %198 = vmatpush1.bf16.msra.mxu0 %v188
    %199 = vmatprep.subr.bf16.mxu0 0
    %200 = vmatpush1.bf16.msra.mxu0 %v187
    %201 = vmatprep.subr.bf16.mxu0 0
    %202 = vmatpush1.bf16.msra.mxu0 %v186
    %203 = vmatprep.subr.bf16.mxu0 0
    %204 = vmatpush1.bf16.msra.mxu0 %v185
    %205 = vmatprep.subr.bf16.mxu0 0
    %206 = vmatpush1.bf16.msra.mxu0 %v184
    %207 = vmatprep.subr.bf16.mxu0 0
    %208 = vmatpush1.bf16.msra.mxu0 %v183
    %209 = vmatprep.subr.bf16.mxu0 0
    %210 = vmatpush1.bf16.msra.mxu0 %v182
    %211 = vmatprep.subr.bf16.mxu0 0
    %212 = vmatpush1.bf16.msra.mxu0 %v181
    %213 = vmatprep.subr.bf16.mxu0 0
    %214 = vmatpush2.bf16.msra.mxu0 0
    %215 = vmatprep.subr.bf16.mxu0 0
    %216 = vmatpush2.bf16.msra.mxu0 0
    %217 = vmatprep.subr.bf16.mxu0 0
    %218 = vmatpush2.bf16.msra.mxu0 0
    %219 = vmatprep.subr.bf16.mxu0 0
    %220 = vmatpush2.bf16.msra.mxu0 0
    %221 = vmatprep.subr.bf16.mxu0 0
    %222 = vmatpush2.bf16.msra.mxu0 0
    %223 = vmatprep.subr.bf16.mxu0 0
    %224 = vmatpush2.bf16.msra.mxu0 0
    %225 = vmatprep.subr.bf16.mxu0 0
    %226 = vmatpush2.bf16.msra.mxu0 0
    %227 = vmatprep.subr.bf16.mxu0 0
    %228 = vmatpush2.bf16.msra.mxu0 0
    %229 = vmatprep.mubr.bf16.mxu0 0
    %230 = vmatmul.mubr.bf16.gmra.mxu0 %v147
    %v231 = vpop.f32.mrf.mxu0
    %v232 = vadd.f32 0.0, %v231
    %v233 = vpop.f32.mrf.mxu0
    %v234 = vpop.f32.mrf.mxu0
    %v235 = vadd.f32 0.0, %v234
    %v236 = vpop.f32.mrf.mxu0
    %237 = vdwg.mxu0
    %v238 = vadd.f32 %v123, %v232
    %v239 = vadd.f32 %v124, %v235
    %240 = vst [vmem:[#allocation2] sm:$0xff] %v238
    %241 = vst [vmem:[#allocation2 + $0x8] sm:$0xff] %v239
    // Predicated region
    $region66: #{tpu_custom_call.1} parent=1 // pred_check
      %p242 = pneg %p117
    $region67: #{tpu_custom_call.1} parent=1 // pred_check_branch
      %244 = sbr.rel (%p242) target = $region69
    $region68: #{tpu_custom_call.1} parent=1 // pred_region
      %v245 = vld [vmem:[#allocation2] sm:$0xff]
      %v246 = vld [vmem:[#allocation2 + $0x8] sm:$0xff]
      %v247 = vld [vmem:[%s2] sm:$0x1]
      %v249 = vlaneseq
      %v250 = vshrl.u32 %v249, 7
      %v251 = vsub.s32 0, %v250
      %v252 = vrot.slane %v247, %v251
      %v254 = vadd.f32 %v245, %v252
      %v255 = vadd.f32 %v246, %v252
      %v256 = vtanh.pop %v254
      %v257 = vtanh.pop %v255
      %v258 = vpack.c.bf16 %v257, %v256
      %v259 = vld [vmem:[#allocation8] sm:$0xf]
      %v260 = vld [vmem:[#allocation8 + $0x4] sm:$0xf]
      %v261 = vld [vmem:[#allocation8 + $0x8] sm:$0xf]
      %v262 = vld [vmem:[#allocation8 + $0xc] sm:$0xf]
      %v263 = vld [vmem:[#allocation8 + $0x10] sm:$0xf]
      %v264 = vld [vmem:[#allocation8 + $0x14] sm:$0xf]
      %v265 = vld [vmem:[#allocation8 + $0x18] sm:$0xf]
      %v266 = vld [vmem:[#allocation8 + $0x1c] sm:$0xf]
      %v267 = vld [vmem:[#allocation8 + $0x20] sm:$0xf]
      %v268 = vld [vmem:[#allocation8 + $0x24] sm:$0xf]
      %v269 = vld [vmem:[#allocation8 + $0x28] sm:$0xf]
      %v270 = vld [vmem:[#allocation8 + $0x2c] sm:$0xf]
      %v271 = vld [vmem:[#allocation8 + $0x30] sm:$0xf]
      %v272 = vld [vmem:[#allocation8 + $0x34] sm:$0xf]
      %v273 = vld [vmem:[#allocation8 + $0x38] sm:$0xf]
      %v274 = vld [vmem:[#allocation8 + $0x3c] sm:$0xf]
      %v275 = vld [vmem:[#allocation9] sm:$0x1]
      %v277 = vlaneseq
      %v278 = vshrl.u32 %v277, 7
      %v279 = vsub.s32 0, %v278
      %v280 = vrot.slane %v275, %v279
      %v298 = vunpack.c.l.b16 %v259
      %v299 = vunpack.c.l.b16 %v260
      %v300 = vunpack.c.l.b16 %v261
      %v301 = vunpack.c.l.b16 %v262
      %v302 = vunpack.c.l.b16 %v263
      %v303 = vunpack.c.l.b16 %v264
      %v304 = vunpack.c.l.b16 %v265
      %v305 = vunpack.c.l.b16 %v266
      %v306 = vunpack.c.l.b16 %v267
      %v307 = vunpack.c.l.b16 %v268
      %v308 = vunpack.c.l.b16 %v269
      %v309 = vunpack.c.l.b16 %v270
      %v310 = vunpack.c.l.b16 %v271
      %v311 = vunpack.c.l.b16 %v272
      %v312 = vunpack.c.l.b16 %v273
      %v313 = vunpack.c.l.b16 %v274
      %v314 = vpack.c.b16 %v299, %v298
      %v315 = vpack.c.b16 %v301, %v300
      %v316 = vpack.c.b16 %v303, %v302
      %v317 = vpack.c.b16 %v305, %v304
      %v318 = vpack.c.b16 %v307, %v306
      %v319 = vpack.c.b16 %v309, %v308
      %v320 = vpack.c.b16 %v311, %v310
      %v321 = vpack.c.b16 %v313, %v312
      %330 = vmatprep.subr.bf16.mxu0 0
      %331 = vmatpush1.bf16.msra.mxu0 %v321
      %332 = vmatprep.subr.bf16.mxu0 0
      %333 = vmatpush1.bf16.msra.mxu0 %v320
      %334 = vmatprep.subr.bf16.mxu0 0
      %335 = vmatpush1.bf16.msra.mxu0 %v319
      %336 = vmatprep.subr.bf16.mxu0 0
      %337 = vmatpush1.bf16.msra.mxu0 %v318
      %338 = vmatprep.subr.bf16.mxu0 0
      %339 = vmatpush1.bf16.msra.mxu0 %v317
      %340 = vmatprep.subr.bf16.mxu0 0
      %341 = vmatpush1.bf16.msra.mxu0 %v316
      %342 = vmatprep.subr.bf16.mxu0 0
      %343 = vmatpush1.bf16.msra.mxu0 %v315
      %344 = vmatprep.subr.bf16.mxu0 0
      %345 = vmatpush1.bf16.msra.mxu0 %v314
      %346 = vmatprep.subr.bf16.mxu0 0
      %347 = vmatpush2.bf16.msra.mxu0 0
      %348 = vmatprep.subr.bf16.mxu0 0
      %349 = vmatpush2.bf16.msra.mxu0 0
      %350 = vmatprep.subr.bf16.mxu0 0
      %351 = vmatpush2.bf16.msra.mxu0 0
      %352 = vmatprep.subr.bf16.mxu0 0
      %353 = vmatpush2.bf16.msra.mxu0 0
      %354 = vmatprep.subr.bf16.mxu0 0
      %355 = vmatpush2.bf16.msra.mxu0 0
      %356 = vmatprep.subr.bf16.mxu0 0
      %357 = vmatpush2.bf16.msra.mxu0 0
      %358 = vmatprep.subr.bf16.mxu0 0
      %359 = vmatpush2.bf16.msra.mxu0 0
      %360 = vmatprep.subr.bf16.mxu0 0
      %361 = vmatpush2.bf16.msra.mxu0 0
      %362 = vmatprep.mubr.bf16.mxu0 0
      %363 = vmatmul.mubr.bf16.gmra.mxu0 %v258
      %v364 = vpop.f32.mrf.mxu0
      %v365 = vadd.f32 %v280, %v364
      %v366 = vpop.f32.mrf.mxu0
      %v367 = vpop.f32.mrf.mxu0
      %v368 = vadd.f32 %v280, %v367
      %v369 = vpop.f32.mrf.mxu0
      %370 = vdwg.mxu0
      %v371 = vpack.c.bf16 %v368, %v365
      %v372 = vld [vmem:[#allocation11] sm:$0xf]
      %v373 = vld [vmem:[#allocation11 + $0x4] sm:$0xf]
      %v374 = vld [vmem:[#allocation11 + $0x8] sm:$0xf]
      %v375 = vld [vmem:[#allocation11 + $0xc] sm:$0xf]
      %v376 = vld [vmem:[#allocation11 + $0x10] sm:$0xf]
      %v377 = vld [vmem:[#allocation11 + $0x14] sm:$0xf]
      %v378 = vld [vmem:[#allocation11 + $0x18] sm:$0xf]
      %v379 = vld [vmem:[#allocation11 + $0x1c] sm:$0xf]
      %v380 = vld [vmem:[#allocation11 + $0x20] sm:$0xf]
      %v381 = vld [vmem:[#allocation11 + $0x24] sm:$0xf]
      %v382 = vld [vmem:[#allocation11 + $0x28] sm:$0xf]
      %v383 = vld [vmem:[#allocation11 + $0x2c] sm:$0xf]
      %v384 = vld [vmem:[#allocation11 + $0x30] sm:$0xf]
      %v385 = vld [vmem:[#allocation11 + $0x34] sm:$0xf]
      %v386 = vld [vmem:[#allocation11 + $0x38] sm:$0xf]
      %v387 = vld [vmem:[#allocation11 + $0x3c] sm:$0xf]
      %v388 = vld [vmem:[%s5] sm:$0xf]
      %v389 = vld [vmem:[%s5 + $0x4] sm:$0xf]
      %v390 = vld [vmem:[#allocation12] sm:$0xf]
      %v391 = vld [vmem:[#allocation12 + $0x4] sm:$0xf]
      %v392 = vld [vmem:[#allocation12 + $0x8] sm:$0xf]
      %v393 = vld [vmem:[#allocation12 + $0xc] sm:$0xf]
      %v394 = vld [vmem:[#allocation12 + $0x10] sm:$0xf]
      %v395 = vld [vmem:[#allocation12 + $0x14] sm:$0xf]
      %v396 = vld [vmem:[#allocation12 + $0x18] sm:$0xf]
      %v397 = vld [vmem:[#allocation12 + $0x1c] sm:$0xf]
      %v398 = vld [vmem:[#allocation12 + $0x20] sm:$0xf]
      %v399 = vld [vmem:[#allocation12 + $0x24] sm:$0xf]
      %v400 = vld [vmem:[#allocation12 + $0x28] sm:$0xf]
      %v401 = vld [vmem:[#allocation12 + $0x2c] sm:$0xf]
      %v402 = vld [vmem:[#allocation12 + $0x30] sm:$0xf]
      %v403 = vld [vmem:[#allocation12 + $0x34] sm:$0xf]
      %v404 = vld [vmem:[#allocation12 + $0x38] sm:$0xf]
      %v405 = vld [vmem:[#allocation12 + $0x3c] sm:$0xf]
      %v408 = vunpack.c.l.b16 %v388
      %v409 = vunpack.c.l.b16 %v389
      %v410 = vpack.c.b16 %v409, %v408
      %v428 = vunpack.c.l.b16 %v390
      %v429 = vunpack.c.l.b16 %v391
      %v430 = vunpack.c.l.b16 %v392
      %v431 = vunpack.c.l.b16 %v393
      %v432 = vunpack.c.l.b16 %v394
      %v433 = vunpack.c.l.b16 %v395
      %v434 = vunpack.c.l.b16 %v396
      %v435 = vunpack.c.l.b16 %v397
      %v436 = vunpack.c.l.b16 %v398
      %v437 = vunpack.c.l.b16 %v399
      %v438 = vunpack.c.l.b16 %v400
      %v439 = vunpack.c.l.b16 %v401
      %v440 = vunpack.c.l.b16 %v402
      %v441 = vunpack.c.l.b16 %v403
      %v442 = vunpack.c.l.b16 %v404
      %v443 = vunpack.c.l.b16 %v405
      %v444 = vpack.c.b16 %v429, %v428
      %v445 = vpack.c.b16 %v431, %v430
      %v446 = vpack.c.b16 %v433, %v432
      %v447 = vpack.c.b16 %v435, %v434
      %v448 = vpack.c.b16 %v437, %v436
      %v449 = vpack.c.b16 %v439, %v438
      %v450 = vpack.c.b16 %v441, %v440
      %v451 = vpack.c.b16 %v443, %v442
      %460 = vmatprep.subr.bf16.mxu0 0
      %461 = vmatpush1.bf16.msra.mxu0 %v451
      %462 = vmatprep.subr.bf16.mxu0 0
      %463 = vmatpush1.bf16.msra.mxu0 %v450
      %464 = vmatprep.subr.bf16.mxu0 0
      %465 = vmatpush1.bf16.msra.mxu0 %v449
      %466 = vmatprep.subr.bf16.mxu0 0
      %467 = vmatpush1.bf16.msra.mxu0 %v448
      %468 = vmatprep.subr.bf16.mxu0 0
      %469 = vmatpush1.bf16.msra.mxu0 %v447
      %470 = vmatprep.subr.bf16.mxu0 0
      %471 = vmatpush1.bf16.msra.mxu0 %v446
      %472 = vmatprep.subr.bf16.mxu0 0
      %473 = vmatpush1.bf16.msra.mxu0 %v445
      %474 = vmatprep.subr.bf16.mxu0 0
      %475 = vmatpush1.bf16.msra.mxu0 %v444
      %476 = vmatprep.subr.bf16.mxu0 0
      %477 = vmatpush2.bf16.msra.mxu0 0
      %478 = vmatprep.subr.bf16.mxu0 0
      %479 = vmatpush2.bf16.msra.mxu0 0
      %480 = vmatprep.subr.bf16.mxu0 0
      %481 = vmatpush2.bf16.msra.mxu0 0
      %482 = vmatprep.subr.bf16.mxu0 0
      %483 = vmatpush2.bf16.msra.mxu0 0
      %484 = vmatprep.subr.bf16.mxu0 0
      %485 = vmatpush2.bf16.msra.mxu0 0
      %486 = vmatprep.subr.bf16.mxu0 0
      %487 = vmatpush2.bf16.msra.mxu0 0
      %488 = vmatprep.subr.bf16.mxu0 0
      %489 = vmatpush2.bf16.msra.mxu0 0
      %490 = vmatprep.subr.bf16.mxu0 0
      %491 = vmatpush2.bf16.msra.mxu0 0
      %492 = vmatprep.mubr.bf16.mxu0 0
      %493 = vmatmul.mubr.bf16.gmra.mxu0 %v410
      %v494 = vpop.f32.mrf.mxu0
      %v495 = vadd.f32 0.0, %v494
      %v496 = vpop.f32.mrf.mxu0
      %v497 = vpop.f32.mrf.mxu0
      %v498 = vadd.f32 0.0, %v497
      %v499 = vpop.f32.mrf.mxu0
      %500 = vdwg.mxu0
      %v517 = vunpack.c.l.b16 %v372
      %v518 = vunpack.c.l.b16 %v373
      %v519 = vunpack.c.l.b16 %v374
      %v520 = vunpack.c.l.b16 %v375
      %v521 = vunpack.c.l.b16 %v376
      %v522 = vunpack.c.l.b16 %v377
      %v523 = vunpack.c.l.b16 %v378
      %v524 = vunpack.c.l.b16 %v379
      %v525 = vunpack.c.l.b16 %v380
      %v526 = vunpack.c.l.b16 %v381
      %v527 = vunpack.c.l.b16 %v382
      %v528 = vunpack.c.l.b16 %v383
      %v529 = vunpack.c.l.b16 %v384
      %v530 = vunpack.c.l.b16 %v385
      %v531 = vunpack.c.l.b16 %v386
      %v532 = vunpack.c.l.b16 %v387
      %v533 = vpack.c.b16 %v518, %v517
      %v534 = vpack.c.b16 %v520, %v519
      %v535 = vpack.c.b16 %v522, %v521
      %v536 = vpack.c.b16 %v524, %v523
      %v537 = vpack.c.b16 %v526, %v525
      %v538 = vpack.c.b16 %v528, %v527
      %v539 = vpack.c.b16 %v530, %v529
      %v540 = vpack.c.b16 %v532, %v531
      %549 = vmatprep.subr.bf16.mxu0 0
      %550 = vmatpush1.bf16.msra.mxu0 %v540
      %551 = vmatprep.subr.bf16.mxu0 0
      %552 = vmatpush1.bf16.msra.mxu0 %v539
      %553 = vmatprep.subr.bf16.mxu0 0
      %554 = vmatpush1.bf16.msra.mxu0 %v538
      %555 = vmatprep.subr.bf16.mxu0 0
      %556 = vmatpush1.bf16.msra.mxu0 %v537
      %557 = vmatprep.subr.bf16.mxu0 0
      %558 = vmatpush1.bf16.msra.mxu0 %v536
      %559 = vmatprep.subr.bf16.mxu0 0
      %560 = vmatpush1.bf16.msra.mxu0 %v535
      %561 = vmatprep.subr.bf16.mxu0 0
      %562 = vmatpush1.bf16.msra.mxu0 %v534
      %563 = vmatprep.subr.bf16.mxu0 0
      %564 = vmatpush1.bf16.msra.mxu0 %v533
      %565 = vmatprep.subr.bf16.mxu0 0
      %566 = vmatpush2.bf16.msra.mxu0 0
      %567 = vmatprep.subr.bf16.mxu0 0
      %568 = vmatpush2.bf16.msra.mxu0 0
      %569 = vmatprep.subr.bf16.mxu0 0
      %570 = vmatpush2.bf16.msra.mxu0 0
      %571 = vmatprep.subr.bf16.mxu0 0
      %572 = vmatpush2.bf16.msra.mxu0 0
      %573 = vmatprep.subr.bf16.mxu0 0
      %574 = vmatpush2.bf16.msra.mxu0 0
      %575 = vmatprep.subr.bf16.mxu0 0
      %576 = vmatpush2.bf16.msra.mxu0 0
      %577 = vmatprep.subr.bf16.mxu0 0
      %578 = vmatpush2.bf16.msra.mxu0 0
      %579 = vmatprep.subr.bf16.mxu0 0
      %580 = vmatpush2.bf16.msra.mxu0 0
      %581 = vmatprep.mubr.bf16.mxu0 0
      %582 = vmatmul.mubr.bf16.gmra.mxu0 %v371
      %v583 = vpop.f32.mrf.mxu0
      %v584 = vadd.f32 %v495, %v583
      %v585 = vpop.f32.mrf.mxu0
      %v586 = vpop.f32.mrf.mxu0
      %v587 = vadd.f32 %v498, %v586
      %v588 = vpop.f32.mrf.mxu0
      %589 = vdwg.mxu0
      %v590 = vld [vmem:[%s8] sm:$0x1]
      %v592 = vlaneseq
      %v593 = vshrl.u32 %v592, 7
      %v594 = vsub.s32 0, %v593
      %v595 = vrot.slane %v590, %v594
      %v597 = vadd.f32 %v584, %v595
      %v598 = vadd.f32 %v587, %v595
      %599 = vst [vmem:[#allocation14] sm:$0xff] %v365
      %600 = vst [vmem:[#allocation14 + $0x8] sm:$0xff] %v368
      %601 = vst [vmem:[#allocation15] sm:$0xff] %v597
      %602 = vst [vmem:[#allocation15 + $0x8] sm:$0xff] %v598
    $region69: #{tpu_custom_call.1} parent=1 // pred_fallthru
      _
    // Predicated region
    $region70: #{tpu_custom_call.1} parent=1 // pred_check
      _
    $region71: #{tpu_custom_call.1} parent=1 // pred_check_branch
      %604 = sbr.rel (0) target = $region73
    $region72: #{tpu_custom_call.1} parent=1 // pred_region
      %s606 = ssub.s32 256, 256
      %607 = vsyncadd [#allocation5], %s606
      %s608 = sshll.u32 [#allocation14], 4
      %s609 = int_to_ptr.vmem [resolvable:$true] %s608
      %614 = dma.vmem_to_hbm [thread:$0]  %s609, 256, %s9, [#allocation5], 128, 128, 8
    $region73: #{tpu_custom_call.1} parent=1 // pred_fallthru
      _
    // Predicated region
    $region74: #{tpu_custom_call.1} parent=1 // pred_check
      _
    $region75: #{tpu_custom_call.1} parent=1 // pred_check_branch
      %616 = sbr.rel (0) target = $region77
    $region76: #{tpu_custom_call.1} parent=1 // pred_region
      %s618 = ssub.s32 256, 256
      %619 = vsyncadd [#allocation16], %s618
      %s620 = sshll.u32 [#allocation15], 4
      %s621 = int_to_ptr.vmem [resolvable:$true] %s620
      %626 = dma.vmem_to_hbm [thread:$0]  %s621, 256, %s10, [#allocation16], 128, 128, 8
    $region77: #{tpu_custom_call.1} parent=1 // pred_fallthru
      _
    // Predicated region
    $region78: #{tpu_custom_call.1} parent=1 // pred_check
      _
    $region79: #{tpu_custom_call.1} parent=1 // pred_check_branch
      %628 = sbr.rel (0) target = $region81
    $region80: #{tpu_custom_call.1} parent=1 // pred_region
      %629 = dma.done [#allocation5], 256
    $region81: #{tpu_custom_call.1} parent=1 // pred_fallthru
      _
    // Predicated region
    $region82: #{tpu_custom_call.1} parent=1 // pred_check
      _
    $region83: #{tpu_custom_call.1} parent=1 // pred_check_branch
      %631 = sbr.rel (0) target = $region85
    $region84: #{tpu_custom_call.1} parent=1 // pred_region
      %632 = dma.done [#allocation16], 256
    $region85: #{tpu_custom_call.1} parent=1 // pred_fallthru
      _
    %633 = vsyncpa [#allocation4], 1
    %634 = vsyncpa [#allocation7], 1
    %635 = vsyncpa [#allocation10], 1
    %636 = vsyncpa [#allocation13], 1
    %637 = vsyncpa [#allocation5], 1
    %638 = vsyncpa [#allocation16], 1

</llo_original>
